<compile_context>
chip_gen: v7x
topology: tpu7x:2x2x1
jax: 0.10.0
libtpu: 0.0.40
codegen_flags: <defaults>
</compile_context>

<pallas_src>
import jax
import jax.numpy as jnp
from jax import lax
from jax.experimental import pallas as pl
from jax.experimental.pallas import tpu as pltpu


def _round_up(x, m):
    return ((x + m - 1) // m) * m


def _cdiv(a, b):
    return (a + b - 1) // b


def _vmem_capacity_bytes():
    """Physical per-core VMEM (v5e/v6e: 128 MiB, v7x: 64 MiB), with fallback."""
    try:
        cap = int(pltpu.get_tpu_info().vmem_capacity_bytes)
        if cap > 0:
            return cap
    except Exception:
        pass
    return 64 * 1024 * 1024  # conservative (v7x per-TensorCore VMEM)


def _resident_table_spec(V, E):
    """Whole table as one block with a constant index map: fetched once and
    kept resident across the grid.  Buffered(1) drops the useless second
    pipeline buffer, doubling the vocab size that fits the fast path
    (matters most on v7x's 64 MiB VMEM)."""
    try:
        return pl.BlockSpec((V, E), lambda i: (0, 0),
                            pipeline_mode=pl.Buffered(1))
    except Exception:  # pipeline_mode / Buffered unavailable -> default 2 bufs
        return pl.BlockSpec((V, E), lambda i: (0, 0))


# ---------------------------------------------------------------------------
# Fast path: resident table + one-hot MXU gather, one dense (T, E) store.
# ---------------------------------------------------------------------------
def _make_one_hot_kernel(T, V):
    def kernel(idx_ref, w_ref, o_ref):
        # idx_ref: (T, 1) int32 tile of token ids (VMEM)
        # w_ref  : (V, E) embedding table, resident in VMEM across the grid
        # o_ref  : (T, E) output tile (lane-dense HBM writeback)
        idx = idx_ref[...]                                   # (T, 1)
        cols = lax.broadcasted_iota(jnp.int32, (T, V), 1)    # (T, V)
        one_hot = (cols == idx).astype(w_ref.dtype)          # vectorized gather
        tile = jnp.dot(one_hot, w_ref[...],                  # (T, E) on the MXU
                       preferred_element_type=jnp.float32)
        o_ref[...] = tile.astype(o_ref.dtype)                # single dense store
    return kernel


def _lookup_one_hot(idx_2d, weight, T, vmem_limit):
    n_pad = idx_2d.shape[0]
    V, E_pad = weight.shape
    n_tiles = n_pad // T

    return pl.pallas_call(
        _make_one_hot_kernel(T, V),
        out_shape=jax.ShapeDtypeStruct((n_pad, E_pad), weight.dtype),
        grid_spec=pltpu.PrefetchScalarGridSpec(
            num_scalar_prefetch=0,
            grid=(n_tiles,),
            in_specs=[
                pl.BlockSpec((T, 1), lambda i: (i, 0)),   # per-tile ids (VMEM)
                _resident_table_spec(V, E_pad),           # table, single buffer
            ],
            out_specs=pl.BlockSpec((T, E_pad), lambda i: (i, 0)),
        ),
        compiler_params=pltpu.CompilerParams(
            dimension_semantics=("parallel",),
            vmem_limit_bytes=vmem_limit,
        ),
    )(idx_2d, weight)


# ---------------------------------------------------------------------------
# Fallback: table stays in HBM; per-row DMAs straight into the output tile
# with a K-deep semaphore ring; per-tile ids staged HBM -> SMEM.
# ---------------------------------------------------------------------------
def _make_dma_gather_kernel(T, K):
    n_prime = min(K, T)

    def kernel(idx_hbm, w_hbm, o_ref, idx_smem, row_sems, idx_sem):
        i = pl.program_id(0)

        # Stage this tile's token ids HBM -> SMEM (constant SMEM footprint
        # regardless of batch*seq).
        idx_cp = pltpu.make_async_copy(
            idx_hbm.at[pl.ds(i, 1), :], idx_smem, idx_sem.at[0])
        idx_cp.start()
        idx_cp.wait()

        def start_row(t):
            row = idx_smem[0, t]
            pltpu.make_async_copy(
                w_hbm.at[pl.ds(row, 1), :],
                o_ref.at[pl.ds(t, 1), :],      # gather straight into the output tile
                row_sems.at[t % K],
            ).start()

        def wait_slot(t):
            # Wait descriptor only needs a matching shape + the right semaphore.
            pltpu.make_async_copy(
                w_hbm.at[pl.ds(0, 1), :],
                o_ref.at[pl.ds(0, 1), :],
                row_sems.at[t % K],
            ).wait()

        # Prime: up to K outstanding row DMAs.
        @pl.loop(0, n_prime)
        def _(t):
            start_row(t)

        # Steady state: build the next copy (and read its row id from SMEM)
        # BEFORE retiring the oldest copy on the same semaphore slot.
        if T > K:
            @pl.loop(K, T)
            def _(t):
                row = idx_smem[0, t]
                nxt = pltpu.make_async_copy(
                    w_hbm.at[pl.ds(row, 1), :],
                    o_ref.at[pl.ds(t, 1), :],
                    row_sems.at[t % K],
                )
                wait_slot(t - K)
                nxt.start()

        # Drain the tail.
        @pl.loop(max(0, T - K), T)
        def _(t):
            wait_slot(t)

    return kernel


def _lookup_dma_gather(idx_2d, weight, T, max_inflight, vmem_limit):
    n_tiles = idx_2d.shape[0]
    _, E_pad = weight.shape
    K = max(1, int(max_inflight))

    return pl.pallas_call(
        _make_dma_gather_kernel(T, K),
        out_shape=jax.ShapeDtypeStruct((n_tiles * T, E_pad), weight.dtype),
        grid_spec=pltpu.PrefetchScalarGridSpec(
            num_scalar_prefetch=0,
            grid=(n_tiles,),
            in_specs=[
                pl.BlockSpec(memory_space=pl.ANY),   # token ids (staged per tile)
                pl.BlockSpec(memory_space=pl.ANY),   # embedding table stays in HBM
            ],
            out_specs=pl.BlockSpec((T, E_pad), lambda i: (i, 0)),
            scratch_shapes=[
                pltpu.SMEM((1, T), jnp.int32),        # this tile's row ids
                pltpu.SemaphoreType.DMA((K,)),        # row-DMA ring
                pltpu.SemaphoreType.DMA((1,)),        # id-staging DMA
            ],
        ),
        compiler_params=pltpu.CompilerParams(
            dimension_semantics=("parallel",),
            vmem_limit_bytes=vmem_limit,
        ),
    )(idx_2d, weight)


# ---------------------------------------------------------------------------
# Public wrapper (nn.Embedding.forward equivalent).
# ---------------------------------------------------------------------------
def embedding_lookup(indices, weight, *, token_tile=256, dma_token_tile=512,
                     one_hot_max_vocab=2048, max_inflight=16,
                     force_dma_gather=False):
    """indices: [B, S] int; weight: [V, E]  ->  [B, S, E] in weight.dtype."""
    assert indices.ndim == 2 and weight.ndim == 2
    assert jnp.issubdtype(indices.dtype, jnp.integer), "indices must be integer"
    B, S = indices.shape
    V, E = weight.shape
    itemsize = weight.dtype.itemsize
    n_tokens = B * S

    # Lane-dense output / row DMAs: pad embed dim to a multiple of 128.
    E_pad = _round_up(E, 128)
    if E_pad != E:
        weight = jnp.pad(weight, ((0, 0), (0, E_pad - E)))

    # nn.Embedding raises on out-of-range ids; clamp so a bad id can never
    # become an out-of-bounds DMA / VMEM read.
    flat_idx = jnp.clip(indices.reshape(-1).astype(jnp.int32), 0, V - 1)

    # Generation-aware scoped-VMEM request (v5e/v6e -> ~96 MiB, v7x -> ~48 MiB).
    vmem_cap = _vmem_capacity_bytes()
    vmem_limit = max(32 * 1024 * 1024, int(0.75 * vmem_cap))

    sub = 8 if itemsize >= 4 else 16  # sublane granularity of the output tile

    def pick_tile(target):
        t = max(sub, min(target, _round_up(n_tokens, sub)))
        t = _round_up(t, sub)
        # Expose >= 2 grid steps so the "parallel" token axis can shard across
        # both TensorCores on v7x (harmless on single-core v5e/v6e).
        if n_tokens > sub and _round_up(n_tokens, t) // t < 2:
            t = max(sub, _round_up(_cdiv(n_tokens, 2), sub))
        return t

    table_bytes = V * E_pad * itemsize
    T_fast = pick_tile(token_tile)
    resident_need = (table_bytes                        # single-buffered table
                     + 2 * T_fast * E_pad * itemsize    # double-buffered out tile
                     + 2 * T_fast * 128 * 4             # (T,1) idx blocks (lane-padded)
                     + (4 << 20))                       # compiler scratch margin
    use_fast = ((not force_dma_gather)
                and V <= one_hot_max_vocab
                and resident_need <= vmem_limit)

    if use_fast:
        T = T_fast
        n_pad = _round_up(n_tokens, T)
        idx = jnp.pad(flat_idx, (0, n_pad - n_tokens)).reshape(n_pad, 1)
        out = _lookup_one_hot(idx, weight, T, vmem_limit)
    else:
        # Keep each (T, E) output buffer to a few MiB so double buffering fits
        # the scoped limit even for large embed dims; otherwise go big (512+)
        # to amortize the ring prime/drain and per-grid-step overhead.
        per_row = E_pad * itemsize
        cap_rows = max(sub, ((2 << 20) // per_row) // sub * sub)
        T = pick_tile(min(dma_token_tile, cap_rows))
        n_pad = _round_up(n_tokens, T)
        idx = jnp.pad(flat_idx, (0, n_pad - n_tokens)).reshape(n_pad // T, T)
        out = _lookup_dma_gather(idx, weight, T, max_inflight, vmem_limit)

    return out[:n_tokens, :E].reshape(B, S, E)


if __name__ == "__main__":
    key = jax.random.PRNGKey(0)
    k_w, k_idx, k_idx2, k_w4 = jax.random.split(key, 4)

    # Deterministic in-script stand-in for the np.load'ed pretrained table.
    vocab_size, word_embed_size = 64, 128
    batch_size, seq_len = 2, 8

    word_embed = jax.random.normal(
        k_w, (vocab_size, word_embed_size), dtype=jnp.float32)
    input_ids = jax.random.randint(
        k_idx, (batch_size, seq_len), 0, vocab_size, dtype=jnp.int32)

    def ref_lookup(ids, table):
        return jnp.take(table, ids.reshape(-1), axis=0).reshape(
            ids.shape + (table.shape[1],))

    def check(out, ref, tol):
        assert out.shape == ref.shape and out.dtype == ref.dtype
        assert bool(jnp.allclose(out, ref, rtol=tol, atol=tol)), "mismatch"

    # 1) Fast path: resident table + one-hot MXU gather (two token tiles).
    #    Tolerance covers worst-case MXU rounding of the f32 one-hot matmul.
    out1 = jax.block_until_ready(embedding_lookup(input_ids, word_embed))
    check(out1, ref_lookup(input_ids, word_embed), 2e-3)

    # 2) More tokens than one tile (400 tokens -> two 256-token tiles + pad).
    ids2 = jax.random.randint(k_idx2, (4, 100), 0, vocab_size, dtype=jnp.int32)
    out2 = jax.block_until_ready(embedding_lookup(ids2, word_embed))
    check(out2, ref_lookup(ids2, word_embed), 2e-3)

    # 3) HBM DMA-gather fallback (forced): per-row DMAs straight into the
    #    output tile through the semaphore ring -> bit-exact rows.
    out3 = jax.block_until_ready(
        embedding_lookup(input_ids, word_embed, force_dma_gather=True))
    check(out3, ref_lookup(input_ids, word_embed), 1e-6)

    # 4) Non-multiple-of-128 embed dim -> lane padding in the wrapper, both paths.
    w4 = jax.random.normal(k_w4, (50, 72), dtype=jnp.float32)
    ids4 = jax.random.randint(jax.random.PRNGKey(7), (3, 11), 0, 50,
                              dtype=jnp.int32)
    ref4 = ref_lookup(ids4, w4)
    check(jax.block_until_ready(embedding_lookup(ids4, w4)), ref4, 2e-3)
    check(jax.block_until_ready(
        embedding_lookup(ids4, w4, force_dma_gather=True)), ref4, 1e-6)

    print("KERNEL_OK")
</pallas_src>

<mosaic_0001>
module attributes {stable_mosaic.version = 11 : i64} {
  func.func @kernel(%arg0: i32, %arg1: memref<8x1xi32, #tpu.memory_space<vmem>>, %arg2: memref<64x128xf32, #tpu.memory_space<vmem>>, %arg3: memref<8x128xf32, #tpu.memory_space<vmem>>) attributes {dimension_semantics = [#tpu.dimension_semantics<parallel>], iteration_bounds = array<i64: 2>, scalar_prefetch = 0 : i64, scratch_operands = 0 : i64, tpu.core_type = #tpu.core_type<tc>, window_params = [{transform_indices = @transform_0, window_bounds = array<i64: 8, 1>}, {pipeline_mode = #tpu.pipeline_mode<synchronous>, transform_indices = @transform_1, window_bounds = array<i64: 64, 128>}, {transform_indices = @transform_2, window_bounds = array<i64: 8, 128>}]} {
    %c0 = arith.constant 0 : index
    %c0_0 = arith.constant 0 : index
    %0 = vector.load %arg1[%c0, %c0_0] : memref<8x1xi32, #tpu.memory_space<vmem>>, vector<8x1xi32>
    %1 = tpu.iota {dimensions = array<i32: 1>} : vector<8x64xi32>
    %2 = vector.broadcast %0 : vector<8x1xi32> to vector<8x64xi32>
    %3 = arith.cmpi eq, %1, %2 : vector<8x64xi32>
    %4 = arith.extui %3 : vector<8x64xi1> to vector<8x64xi32>
    %5 = arith.sitofp %4 : vector<8x64xi32> to vector<8x64xf32>
    %c0_1 = arith.constant 0 : index
    %c0_2 = arith.constant 0 : index
    %6 = vector.load %arg2[%c0_1, %c0_2] : memref<64x128xf32, #tpu.memory_space<vmem>>, vector<64x128xf32>
    %cst = arith.constant dense<0.000000e+00> : vector<8x128xf32>
    %7 = tpu.matmul %5, %6, %cst {dimension_numbers = #tpu.dot_dimension_numbers<[1], [0], [0], [1], [0, 0, 1, 1], [], []>} : vector<8x64xf32>, vector<64x128xf32>, vector<8x128xf32> -> vector<8x128xf32>
    %c0_3 = arith.constant 0 : index
    %c0_4 = arith.constant 0 : index
    %8 = vector.load %arg3[%c0_3, %c0_4] : memref<8x128xf32, #tpu.memory_space<vmem>>, vector<8x128xf32>
    tpu.vector_store %arg3[%c0_3, %c0_4], %7 {strides = array<i32>} : memref<8x128xf32, #tpu.memory_space<vmem>>, vector<8x128xf32>,
    return
  }
  func.func @transform_0(%arg0: i32) -> (i32, i32) {
    %c0_i32 = arith.constant 0 : i32
    %c0_i32_0 = arith.constant 0 : i32
    return %arg0, %c0_i32 : i32, i32
  }
  func.func @transform_1(%arg0: i32) -> (i32, i32) {
    %c0_i32 = arith.constant 0 : i32
    %c0_i32_0 = arith.constant 0 : i32
    %c0_i32_1 = arith.constant 0 : i32
    return %c0_i32, %c0_i32_0 : i32, i32
  }
  func.func @transform_2(%arg0: i32) -> (i32, i32) {
    %c0_i32 = arith.constant 0 : i32
    %c0_i32_0 = arith.constant 0 : i32
    return %arg0, %c0_i32 : i32, i32
  }
}

</mosaic_0001>

<llo_original>
// kernel: tpu_custom_call.1
$region0: #{tpu_custom_call.1}
  #allocation0 [shape = 'u32[]', space=smem, size = 0x4, offset = 0x4, fixed_abs, tag = 'smem constant byte address 0x4 - core index']
  #allocation1 [shape = 'u32[144,128]{1,0:T(1,128)}', space=vmem, size = 0x12000, scoped, tag = 'internal scratch']
  %s0 = inlined_call_operand.vmem [shape: s32[16,1], index: 0, kind: input, shape index: {}]
  %s1 = inlined_call_operand.hbm [shape: f32[64,128], index: 1, kind: input, shape index: {}]
  %s2 = inlined_call_operand.hbm [shape: f32[16,128], index: 2, kind: output, shape index: {}]
  %s3 = sld [smem:[#allocation0]]
  $region45: #{tpu_custom_call.1} parent=0
    _
  %s5 = ssub.s32 1, %s3
  %s6 = scalar_select 0, %s5, %s3
  $region1: #{tpu_custom_call.1} parent=0
    #allocation2 [shape = 'u8[32768]{0}', space=vmem, size = 0x8000, scoped, tag = 'input window, operand 1, single buffered']
    #allocation3 [shape = 's32[2]{0}', space=sflag, size = 0x8, scoped, tag = 'scoped memory for tpu_custom_call.1']
    #allocation4 [shape = 's32[2]{0}', space=sflag, size = 0x8, scoped, tag = 'scoped memory for tpu_custom_call.1']
    #allocation5 [shape = 'u8[8192]{0}', space=vmem, size = 0x2000, scoped, tag = 'output window, operand 0']
    %7 = vsyncpa [#allocation3], 0
    %8 = vsyncpa [#allocation4], 0
    %s9 = scalar_lea.sflag [#allocation4], 1
    %10 = vsyncpa %s9, 0
    loop: start=0, step=1, limit=4
    $region2: #{tpu_custom_call.1} parent=1 // loop_pre_header
      _
    $region3: #{tpu_custom_call.1} parent=1 // loop_header
      %s12 = sphi 0, %s16
      %p13 = scmp.ge.s32.totalorder %s12, 4
      %s22 = sphi 0, %s24
      %s25 = sphi 0, %s22
      %s26 = sphi 0, %s25
      %s42 = sphi 0, %s26
      %s46 = sphi 0, %s46
      %s48 = sphi 0, %s46
      %s49 = sphi 0, %s48
      %s63 = sphi 0, %s49
      %s69 = sphi 0, %s71
      %s72 = sphi 0, %s69
      %s73 = sphi 0, %s72
      %s89 = sphi 0, %s73
    $region4: #{tpu_custom_call.1} parent=1 // loop_header_branch
      %15 = sbr.rel (%p13) target = $region8
    $region5: #{tpu_custom_call.1} parent=1 // loop_body
      %s17 = ssub.s32 %s12, 1
      %s18 = ssub.s32 %s12, 2
      %s19 = sadd.s32 %s12, 1
      %s20 = ssub.s32 %s12, %s19
      %p21 = scmp.eq.s32.totalorder %s20, 0
      %s23 = sadd.s32 %s22, 1
      %s24 = scalar_select %p21, %s22, %s23
      %p27 = pneg %p21
      %p28 = scmp.eq.s32.totalorder %s12, 1
      %p29 = por %p27, %p28
      %p30 = scmp.ne.s32.totalorder %s22, %s25
      %p31 = scmp.eq.s32.totalorder %s12, 0
      %p32 = por %p30, %p31
      %p33 = scmp.ne.s32.totalorder %s22, %s25
      %p34 = scmp.eq.s32.totalorder %s17, 1
      %p35 = por %p33, %p34
      %p36 = scmp.ne.s32.totalorder %s25, %s26
      %p37 = scmp.eq.s32.totalorder %s17, 0
      %p38 = por %p36, %p37
      %p39 = scmp.ne.s32.totalorder %s25, %s26
      %p40 = scmp.eq.s32.totalorder %s18, 1
      %p41 = por %p39, %p40
      %p43 = scmp.ne.s32.totalorder %s26, %s42
      %p44 = scmp.eq.s32.totalorder %s18, 0
      %p45 = por %p43, %p44
      %s47 = sadd.s32 %s46, 1
      %p50 = scmp.eq.s32.totalorder %s12, 1
      %p51 = scmp.ne.s32.totalorder %s46, %s48
      %p52 = scmp.eq.s32.totalorder %s12, 0
      %p53 = por %p51, %p52
      %p54 = scmp.ne.s32.totalorder %s46, %s48
      %p55 = scmp.eq.s32.totalorder %s17, 1
      %p56 = por %p54, %p55
      %p57 = scmp.ne.s32.totalorder %s48, %s49
      %p58 = scmp.eq.s32.totalorder %s17, 0
      %p59 = por %p57, %p58
      %p60 = scmp.ne.s32.totalorder %s48, %s49
      %p61 = scmp.eq.s32.totalorder %s18, 1
      %p62 = por %p60, %p61
      %p64 = scmp.ne.s32.totalorder %s49, %s63
      %p65 = scmp.eq.s32.totalorder %s18, 0
      %p66 = por %p64, %p65
      %s67 = ssub.s32 %s12, %s19
      %p68 = scmp.eq.s32.totalorder %s67, 0
      %s70 = sadd.s32 %s69, 1
      %s71 = scalar_select %p68, %s69, %s70
      %p74 = pneg %p68
      %p75 = scmp.eq.s32.totalorder %s12, 1
      %p76 = por %p74, %p75
      %p77 = scmp.ne.s32.totalorder %s69, %s72
      %p78 = scmp.eq.s32.totalorder %s12, 0
      %p79 = por %p77, %p78
      %p80 = scmp.ne.s32.totalorder %s69, %s72
      %p81 = scmp.eq.s32.totalorder %s17, 1
      %p82 = por %p80, %p81
      %p83 = scmp.ne.s32.totalorder %s72, %s73
      %p84 = scmp.eq.s32.totalorder %s17, 0
      %p85 = por %p83, %p84
      %p86 = scmp.ne.s32.totalorder %s72, %s73
      %p87 = scmp.eq.s32.totalorder %s18, 1
      %p88 = por %p86, %p87
      %p90 = scmp.ne.s32.totalorder %s73, %s89
      %p91 = scmp.eq.s32.totalorder %s18, 0
      %p92 = por %p90, %p91
      %p93 = scmp.le.s32.totalorder 1, %s12
      %p94 = scmp.lt.s32.totalorder %s12, 3
      %p95 = pnand %p93, %p94
      %p96 = pneg %p95
      // Predicated region
      $region9: #{tpu_custom_call.1} parent=5 // pred_check
        _
      $region10: #{tpu_custom_call.1} parent=5 // pred_check_branch
        %98 = sbr.rel (%p95) target = $region12
      $region11: #{tpu_custom_call.1} parent=5 // pred_region
        %s99 = ssub.s32 %s12, 1
        // Predicated region
        $region13: #{tpu_custom_call.1} parent=11 // pred_check
          %p100 = pneg %p59
        $region14: #{tpu_custom_call.1} parent=11 // pred_check_branch
          %102 = sbr.rel (%p100) target = $region16
        $region15: #{tpu_custom_call.1} parent=11 // pred_region
          %s104 = ssub.s32 1024, 1024
          %105 = vsyncadd [#allocation3], %s104
          %s106 = sshll.u32 [#allocation2], 4
          %s107 = int_to_ptr.vmem [resolvable:$true] %s106
          %112 = dma.hbm_to_vmem [thread:$0]  %s1, 1024, %s107, [#allocation3], 128, 128, 8
        $region16: #{tpu_custom_call.1} parent=11 // pred_fallthru
          _
      $region12: #{tpu_custom_call.1} parent=5 // pred_fallthru
        _
      %p113 = scmp.lt.s32.totalorder %s12, 2
      // Predicated region
      $region17: #{tpu_custom_call.1} parent=5 // pred_check
        %p114 = pneg %p113
      $region18: #{tpu_custom_call.1} parent=5 // pred_check_branch
        %116 = sbr.rel (%p114) target = $region20
      $region19: #{tpu_custom_call.1} parent=5 // pred_region
        // Predicated region
        $region21: #{tpu_custom_call.1} parent=19 // pred_check
          %p117 = pneg %p32
        $region22: #{tpu_custom_call.1} parent=19 // pred_check_branch
          %119 = sbr.rel (%p117) target = $region24
        $region23: #{tpu_custom_call.1} parent=19 // pred_region
          %p120 = scmp.lt.s32.totalorder %s12, 1
          %s121 = scalar_select %p120, %s12, 1
          %s122 = smul.addr %s121, 8
          %s123 = scalar_lea.vmem %s0, %s122
        $region24: #{tpu_custom_call.1} parent=19 // pred_fallthru
          _
      $region20: #{tpu_custom_call.1} parent=5 // pred_fallthru
        _
      %p124 = scmp.le.s32.totalorder 1, %s12
      %p125 = scmp.lt.s32.totalorder %s12, 3
      %p126 = pnand %p124, %p125
      %p127 = pneg %p126
      // Predicated region
      $region25: #{tpu_custom_call.1} parent=5 // pred_check
        _
      $region26: #{tpu_custom_call.1} parent=5 // pred_check_branch
        %129 = sbr.rel (%p126) target = $region28
      $region27: #{tpu_custom_call.1} parent=5 // pred_region
        %s130 = ssub.s32 %s12, 1
        // Predicated region
        $region29: #{tpu_custom_call.1} parent=27 // pred_check
          %p131 = pneg %p59
        $region30: #{tpu_custom_call.1} parent=27 // pred_check_branch
          %133 = sbr.rel (%p131) target = $region32
        $region31: #{tpu_custom_call.1} parent=27 // pred_region
          %134 = dma.done [#allocation3], 1024
        $region32: #{tpu_custom_call.1} parent=27 // pred_fallthru
          _
        %p135 = scmp.lt.s32.totalorder %s17, 1
        %s136 = scalar_select %p135, %s17, 1
        %s137 = smul.addr %s136, 8
        %s138 = scalar_lea.vmem %s0, %s137
        %p139 = pneg %p38
        %p140 = pneg %p35
        %p141 = pneg %p59
        %p142 = pneg %p56
        %p143 = pneg %p85
        %p144 = pneg %p82
        %s145 = sand.u32 %s72, 1
        %s146 = scalar_lea.sflag [#allocation4], %s145
        %s147 = sand.u32 %s72, 1
        %s148 = smul.addr %s147, 8
        %s149 = scalar_lea.vmem [#allocation5], %s148
        %p150 = scmp.lt.s32.totalorder %s17, 1
        %s151 = scalar_select %p150, %s17, 1
        %s152 = smul.addr %s151, 8
        %s153 = scalar_lea.vmem %s0, %s152
        %v154 = vld [vmem:[%s153] sm:$0xff]
        %v155 = vlaneseq
        %v156 = vand.u32 %v155, 127
        %157 = vset.pattern.permute.xlu0 0
        %158 = vperm.xlu0 %157, %v154
        %v159 = vpop.permute.xlu0 %158
        %vm160 = vcmp.eq.s32.totalorder %v156, %v159
        %v161 = vsel %vm160, 1, 0
        %v162 = vcvt.s32.f32 %v161
        %v163 = vld [vmem:[#allocation2] sm:$0xff]
        %v164 = vld [vmem:[#allocation2 + $0x8] sm:$0xff]
        %v165 = vld [vmem:[#allocation2 + $0x10] sm:$0xff]
        %v166 = vld [vmem:[#allocation2 + $0x18] sm:$0xff]
        %v167 = vld [vmem:[#allocation2 + $0x20] sm:$0xff]
        %v168 = vld [vmem:[#allocation2 + $0x28] sm:$0xff]
        %v169 = vld [vmem:[#allocation2 + $0x30] sm:$0xff]
        %v170 = vld [vmem:[#allocation2 + $0x38] sm:$0xff]
        %vm171 = vcmask 523264
        %v173 = vsel %vm171, %v162, 0
        %175 = vmatprep.subr.mxu0 0.0
        %176 = vmatpush1.msra.mxu0 %v163
        %177 = vmatprep.subr.mxu0 0.0
        %178 = vmatpush1.msra.mxu0 %v164
        %179 = vmatprep.subr.mxu0 0.0
        %180 = vmatpush1.msra.mxu0 %v165
        %181 = vmatprep.subr.mxu0 0.0
        %182 = vmatpush1.msra.mxu0 %v166
        %183 = vmatprep.subr.mxu0 0.0
        %184 = vmatpush1.msra.mxu0 %v167
        %185 = vmatprep.subr.mxu0 0.0
        %186 = vmatpush1.msra.mxu0 %v168
        %187 = vmatprep.subr.mxu0 0.0
        %188 = vmatpush1.msra.mxu0 %v169
        %189 = vmatprep.subr.mxu0 0.0
        %190 = vmatpush1.msra.mxu0 %v170
        %191 = vmatprep.subr.mxu0 0.0
        %192 = vmatpush1.msra.mxu0 0.0
        %193 = vmatprep.subr.mxu0 0.0
        %194 = vmatpush1.msra.mxu0 0.0
        %195 = vmatprep.subr.mxu0 0.0
        %196 = vmatpush1.msra.mxu0 0.0
        %197 = vmatprep.subr.mxu0 0.0
        %198 = vmatpush1.msra.mxu0 0.0
        %199 = vmatprep.subr.mxu0 0.0
        %200 = vmatpush1.msra.mxu0 0.0
        %201 = vmatprep.subr.mxu0 0.0
        %202 = vmatpush1.msra.mxu0 0.0
        %203 = vmatprep.subr.mxu0 0.0
        %204 = vmatpush1.msra.mxu0 0.0
        %205 = vmatprep.subr.mxu0 0.0
        %206 = vmatpush1.msra.mxu0 0.0
        %207 = vmatprep.subr.mxu0 0.0
        %208 = vmatpush1.msra.mxu0 0.0
        %209 = vmatprep.subr.mxu0 0.0
        %210 = vmatpush1.msra.mxu0 0.0
        %211 = vmatprep.subr.mxu0 0.0
        %212 = vmatpush1.msra.mxu0 0.0
        %213 = vmatprep.subr.mxu0 0.0
        %214 = vmatpush1.msra.mxu0 0.0
        %215 = vmatprep.subr.mxu0 0.0
        %216 = vmatpush1.msra.mxu0 0.0
        %217 = vmatprep.subr.mxu0 0.0
        %218 = vmatpush1.msra.mxu0 0.0
        %219 = vmatprep.subr.mxu0 0.0
        %220 = vmatpush1.msra.mxu0 0.0
        %221 = vmatprep.subr.mxu0 0.0
        %222 = vmatpush1.msra.mxu0 0.0
        %223 = vmatprep.subr.mxu0 0.0
        %224 = vmatpush1.msra.mxu0 0.0
        %225 = vmatprep.subr.mxu0 0.0
        %226 = vmatpush1.msra.mxu0 0.0
        %227 = vmatprep.subr.mxu0 0.0
        %228 = vmatpush1.msra.mxu0 0.0
        %229 = vmatprep.subr.mxu0 0.0
        %230 = vmatpush1.msra.mxu0 0.0
        %231 = vmatprep.subr.mxu0 0.0
        %232 = vmatpush1.msra.mxu0 0.0
        %233 = vmatprep.subr.mxu0 0.0
        %234 = vmatpush1.msra.mxu0 0.0
        %235 = vmatprep.subr.mxu0 0.0
        %236 = vmatpush1.msra.mxu0 0.0
        %237 = vmatprep.subr.mxu0 0.0
        %238 = vmatpush1.msra.mxu0 0.0
        %239 = vmatprep.mubr.f32.mxu0 0.0
        %240 = vmatmul.mubr.f32.gmra.mrb[0].mxu0 %v173
        %v241 = vpop.f32.mrb[0].mxu0
        %v242 = vadd.f32 0.0, %v241
        %v243 = vpop.f32.mrb[0].mxu0
        %244 = vdwg.mxu0
        %245 = vst [vmem:[%s149] sm:$0xff] %v242
        %s246 = sand.u32 %s72, 1
        %s247 = scalar_lea.sflag [#allocation4], %s246
        %s248 = sand.u32 %s72, 1
        %s249 = smul.addr %s248, 8
        %s250 = scalar_lea.vmem [#allocation5], %s249
        // Predicated region
        $region33: #{tpu_custom_call.1} parent=27 // pred_check
          %p251 = pneg %p82
        $region34: #{tpu_custom_call.1} parent=27 // pred_check_branch
          %253 = sbr.rel (%p251) target = $region36
        $region35: #{tpu_custom_call.1} parent=27 // pred_region
          %s255 = ssub.s32 128, 128
          %256 = vsyncadd %s247, %s255
          %s257 = smul.addr %s17, 128
          %s258 = scalar_lea.hbm %s2, %s257
          %s260 = sshll.u32 %s250, 4
          %s261 = int_to_ptr.vmem [resolvable:$true] %s260
          %263 = dma.vmem_to_hbm [thread:$0]  %s261, 128, %s258, %s247
        $region36: #{tpu_custom_call.1} parent=27 // pred_fallthru
          _
      $region28: #{tpu_custom_call.1} parent=5 // pred_fallthru
        _
      %p264 = scmp.le.s32.totalorder 2, %s12
      // Predicated region
      $region37: #{tpu_custom_call.1} parent=5 // pred_check
        %p265 = pneg %p264
      $region38: #{tpu_custom_call.1} parent=5 // pred_check_branch
        %267 = sbr.rel (%p265) target = $region40
      $region39: #{tpu_custom_call.1} parent=5 // pred_region
        %s268 = ssub.s32 %s12, 2
        // Predicated region
        $region41: #{tpu_custom_call.1} parent=39 // pred_check
          %p269 = pneg %p88
        $region42: #{tpu_custom_call.1} parent=39 // pred_check_branch
          %271 = sbr.rel (%p269) target = $region44
        $region43: #{tpu_custom_call.1} parent=39 // pred_region
          %s272 = sand.u32 %s73, 1
          %s273 = scalar_lea.sflag [#allocation4], %s272
          %s274 = sand.u32 %s73, 1
          %s275 = smul.addr %s274, 8
          %s276 = scalar_lea.vmem [#allocation5], %s275
          %277 = dma.done %s273, 128
        $region44: #{tpu_custom_call.1} parent=39 // pred_fallthru
          _
      $region40: #{tpu_custom_call.1} parent=5 // pred_fallthru
        _
    $region6: #{tpu_custom_call.1} parent=1 // loop_footer
      %s16 = sadd.s32 1, %s12
    $region7: #{tpu_custom_call.1} parent=1 // loop_footer_branch
      %11 = sbr.rel target = $region3
    $region8: #{tpu_custom_call.1} parent=1 // loop_exit
      _
    %278 = vsyncpa [#allocation3], 1
    %s279 = scalar_lea.sflag [#allocation3], 1
    %280 = vsyncpa %s279, 1
    %281 = vsyncpa [#allocation4], 1
    %s282 = scalar_lea.sflag [#allocation4], 1
    %283 = vsyncpa %s282, 1

</llo_original>
